<compile_context>
chip_gen: v5e
topology: v5e:2x2
jax: 0.10.0
libtpu: 0.0.40
codegen_flags: <defaults>
</compile_context>

<pallas_src>
import functools

import jax
import jax.numpy as jnp
from jax import lax
from jax.experimental import pallas as pl
from jax.experimental.pallas import tpu as pltpu


def _round_up(x, m):
    return ((x + m - 1) // m) * m


def _pad_cols(x, total_cols):
    pad = total_cols - x.shape[1]
    if pad > 0:
        x = jnp.pad(x, ((0, 0), (0, pad)))
    return x


def _vmem_budget_bytes():
    # ~75% of per-core VMEM; conservative 64 MiB (v7x per-TC) fallback.
    try:
        cap = int(pltpu.get_tpu_info().vmem_capacity_bytes)
    except Exception:
        cap = 64 << 20
    return int(cap * 0.75)


def _cka_kernel(feats_ref, embed_ref, target_ref, cka_ref, loss_ref,
                gram_f_acc, gram_e_acc):
    k = pl.program_id(0)
    n_k = pl.num_programs(0)
    n = gram_f_acc.shape[0]

    # ---- Streamed feats gram over the feature (D1) axis. ----
    # Batch-mean centering is per-column, so it composes with D tiling.
    # Elementwise math in f32 (v5e has no bf16 VPU), MXU fed bf16, f32 accum.
    f = feats_ref[...].astype(jnp.float32)
    f = (f - jnp.mean(f, axis=0, keepdims=True)).astype(jnp.bfloat16)

    @pl.when(k == 0)
    def _init():
        gram_f_acc[...] = jnp.zeros_like(gram_f_acc)
        # The embed block is resident (same block index every grid step, so no
        # re-DMA): compute its gram exactly once.  Zero-padded columns do not
        # change e @ e.T.
        e = embed_ref[...]
        gram_e_acc[...] = lax.dot_general(
            e, e, (((1,), (1,)), ((), ())),
            preferred_element_type=jnp.float32)

    gram_f_acc[...] += lax.dot_general(
        f, f, (((1,), (1,)), ((), ())), preferred_element_type=jnp.float32)

    # ---- Epilogue: unbiased-HSIC centering (in place), norms, CKA, loss. ----
    @pl.when(k == n_k - 1)
    def _finalize():
        row = lax.broadcasted_iota(jnp.int32, (n, n), 0)
        col = lax.broadcasted_iota(jnp.int32, (n, n), 1)
        off_diag = (row != col).astype(jnp.float32)        # built once, reused
        ones_col = jnp.ones((n, 1), jnp.float32)

        def center_inplace(acc):
            g = acc[...] * off_diag                        # subtract_diag
            # column means: cheap sublane reduce
            col_means = jnp.sum(g, axis=0, keepdims=True) / (n - 2)   # (1, n)
            # g is symmetric -> row means == col means.  MXU matvec instead of
            # a cross-lane XLU reduce (or a (1,n)->(n,1) transpose).
            row_means = lax.dot_general(
                g, ones_col, (((1,), (0,)), ((), ())),
                preferred_element_type=jnp.float32) / (n - 2)         # (n, 1)
            total = jnp.sum(col_means) / (2 * (n - 1))
            g = g - (row_means - total)                    # gram -= means[:, None]
            g = g - (col_means - total)                    # gram -= means[None, :]
            acc[...] = g * off_diag                        # subtract_diag, in place

        center_inplace(gram_f_acc)
        center_inplace(gram_e_acc)

        # Single fused pass over both centered grams while they are hot.
        cs = gram_f_acc[...]
        es = gram_e_acc[...]
        s_cc = jnp.sum(cs * cs)
        s_ee = jnp.sum(es * es)
        s_ce = jnp.sum(cs * es)

        cka = s_ce / (jnp.sqrt(s_cc) * jnp.sqrt(s_ee))
        target = target_ref[0]
        loss = jnp.maximum(jnp.float32(0.0), target - cka) ** 2

        cka_ref[0] = cka
        loss_ref[0] = loss


@functools.partial(jax.jit, static_argnames=("pool_size",))
def attribute_embeddings_forward(feats, label_idxs, target, embed_weight,
                                 pool_size=2):
    """Mirrors AttributeEmbeddings.forward(feats, label_idxs, target)."""
    # pool_feats: adaptive_avg_pool2d(feats, pool_size), then flatten.
    # TODO(synk): assumes H, W divisible by pool_size (uniform bins); torch's
    # adaptive_avg_pool2d uses uneven bins for non-divisible sizes.
    if feats.ndim > 2:
        N, C, H, W = feats.shape
        ph = pw = pool_size
        feats = feats.reshape(N, C, ph, H // ph, pw, W // pw).mean(axis=(3, 5))
    feats = feats.reshape(feats.shape[0], -1)

    # torch.index_select(self.embed.weight, 0, label_idxs)
    embed = jnp.take(embed_weight, label_idxs, axis=0)

    N, D1 = feats.shape
    D2 = embed.shape[1]

    # bf16 across HBM/VMEM and into the MXU; accumulation stays f32 in-kernel.
    # (Input quantization only: CKA differs from the f32 torch reference at
    # ~1e-3 relative.)
    feats = feats.astype(jnp.bfloat16)
    embed = embed.astype(jnp.bfloat16)

    # Embed gets a single lane-aligned resident block.
    de_pad = _round_up(D2, 128)
    embed = _pad_cols(embed, de_pad)

    # ---- VMEM-budget-driven chunking of the feats feature axis. ----
    budget = _vmem_budget_bytes()
    fixed = (2 * N * N * 4            # two (N, N) f32 gram accumulators
             + 3 * N * N * 4          # epilogue temporaries (in-place centering)
             + 2 * N * de_pad * 2     # resident bf16 embed block (dbl-buffered)
             + (2 << 20))             # Mosaic internal scratch headroom
    avail = max(budget - fixed, 4 * N * 128 * 2)
    tk_budget = max(128, (avail // (2 * N * 2)) // 128 * 128)  # dbl-buffered bf16

    d1_pad128 = _round_up(max(D1, 1), 128)
    if d1_pad128 <= tk_budget:
        n_chunks = 1                       # whole padded feats fits in VMEM
        tk_f = d1_pad128
    else:
        n_chunks = int(pl.cdiv(d1_pad128, tk_budget))
        tk_f = _round_up(-(-D1 // n_chunks), 128)   # equal chunks, minimal tail pad
    feats = _pad_cols(feats, n_chunks * tk_f)       # fused with pooling under jit

    target_arr = jnp.asarray(target, jnp.float32).reshape(1)

    cka, loss = pl.pallas_call(
        _cka_kernel,
        out_shape=(jax.ShapeDtypeStruct((1,), jnp.float32),
                   jax.ShapeDtypeStruct((1,), jnp.float32)),
        grid=(n_chunks,),
        in_specs=[pl.BlockSpec((N, tk_f), lambda k: (0, k)),
                  pl.BlockSpec((N, de_pad), lambda k: (0, 0)),  # resident block
                  pl.BlockSpec(memory_space=pltpu.MemorySpace.SMEM)],
        out_specs=(pl.BlockSpec(memory_space=pltpu.MemorySpace.SMEM),
                   pl.BlockSpec(memory_space=pltpu.MemorySpace.SMEM)),
        scratch_shapes=[pltpu.VMEM((N, N), jnp.float32),
                        pltpu.VMEM((N, N), jnp.float32)],
        compiler_params=pltpu.CompilerParams(
            dimension_semantics=("arbitrary",),
            vmem_limit_bytes=int(budget)),
    )(feats, embed, target_arr)

    # torch returns (scalar cka, shape-(1,) hinge^2 loss)
    return cka[0], loss


if __name__ == "__main__":
    key = jax.random.PRNGKey(0)
    k_feat, k_emb, k_idx = jax.random.split(key, 3)

    # Small shapes consistent with the module's forward:
    #   feats: (batch, channels, H, W); embedding table (num_classes, embed_dims)
    N, C, H, W = 8, 4, 16, 16
    num_classes, embed_dims = 10, 32
    pool_size = 2

    feats = jax.random.normal(k_feat, (N, C, H, W), dtype=jnp.float32)
    # nn.Embedding weights are loaded from files in the reference module;
    # deterministic synthetic weights here.
    embed_weight = jax.random.normal(k_emb, (num_classes, embed_dims),
                                     dtype=jnp.float32)
    label_idxs = jax.random.randint(k_idx, (N,), 0, num_classes, dtype=jnp.int32)
    target = jnp.float32(0.8)

    cka, loss = attribute_embeddings_forward(feats, label_idxs, target,
                                             embed_weight, pool_size=pool_size)
    jax.block_until_ready((cka, loss))
    print("KERNEL_OK")
</pallas_src>

<mosaic_0001>
module attributes {stable_mosaic.version = 11 : i64} {
  func.func @_cka_kernel(%arg0: i32, %arg1: memref<8x128xbf16, #tpu.memory_space<vmem>>, %arg2: memref<8x128xbf16, #tpu.memory_space<vmem>>, %arg3: memref<1xf32, #tpu.memory_space<smem>>, %arg4: memref<1xf32, #tpu.memory_space<smem>>, %arg5: memref<1xf32, #tpu.memory_space<smem>>, %arg6: memref<8x8xf32, #tpu.memory_space<vmem>>, %arg7: memref<8x8xf32, #tpu.memory_space<vmem>>) attributes {dimension_semantics = [#tpu.dimension_semantics<arbitrary>], iteration_bounds = array<i64: 1>, scalar_prefetch = 0 : i64, scratch_operands = 2 : i64, tpu.core_type = #tpu.core_type<tc>, window_params = [{transform_indices = @transform_0, window_bounds = array<i64: 8, 128>}, {pipeline_mode = #tpu.pipeline_mode<synchronous>, transform_indices = @transform_1, window_bounds = array<i64: 8, 128>}, {transform_indices = @transform_2, window_bounds = array<i64: 1>}, {transform_indices = @transform_3, window_bounds = array<i64: 1>}, {transform_indices = @transform_4, window_bounds = array<i64: 1>}]} {
    %c0 = arith.constant 0 : index
    %c0_0 = arith.constant 0 : index
    %0 = vector.load %arg1[%c0, %c0_0] : memref<8x128xbf16, #tpu.memory_space<vmem>>, vector<8x128xbf16>
    %1 = arith.extf %0 : vector<8x128xbf16> to vector<8x128xf32>
    %cst = arith.constant dense<0.000000e+00> : vector<128xf32>
    %2 = vector.multi_reduction <add>, %1, %cst [0] : vector<8x128xf32> to vector<128xf32>
    %3 = vector.shape_cast %2 : vector<128xf32> to vector<1x128xf32>
    %cst_1 = arith.constant 8.000000e+00 : f32
    %4 = vector.broadcast %cst_1 : f32 to vector<1x128xf32>
    %5 = arith.divf %3, %4 : vector<1x128xf32>
    %6 = vector.broadcast %5 : vector<1x128xf32> to vector<8x128xf32>
    %7 = arith.subf %1, %6 : vector<8x128xf32>
    %8 = arith.truncf %7 : vector<8x128xf32> to vector<8x128xbf16>
    %c0_i32 = arith.constant 0 : i32
    %9 = arith.cmpi eq, %arg0, %c0_i32 : i32
    %10 = arith.extui %9 : i1 to i32
    %c0_i32_2 = arith.constant 0 : i32
    %11 = arith.cmpi ne, %10, %c0_i32_2 : i32
    scf.if %11 {
      %cst_10 = arith.constant 0.000000e+00 : f32
      %19 = vector.broadcast %cst_10 : f32 to vector<8x8xf32>
      %c0_11 = arith.constant 0 : index
      %c0_12 = arith.constant 0 : index
      %20 = vector.load %arg6[%c0_11, %c0_12] : memref<8x8xf32, #tpu.memory_space<vmem>>, vector<8x8xf32>
      tpu.vector_store %arg6[%c0_11, %c0_12], %19 {strides = array<i32>} : memref<8x8xf32, #tpu.memory_space<vmem>>, vector<8x8xf32>,
      %c0_13 = arith.constant 0 : index
      %c0_14 = arith.constant 0 : index
      %21 = vector.load %arg2[%c0_13, %c0_14] : memref<8x128xbf16, #tpu.memory_space<vmem>>, vector<8x128xbf16>
      %cst_15 = arith.constant dense<0.000000e+00> : vector<8x8xf32>
      %22 = tpu.matmul %21, %21, %cst_15 {dimension_numbers = #tpu.dot_dimension_numbers<[1], [1], [0], [0], [0, 0, 1, 0], [], []>} : vector<8x128xbf16>, vector<8x128xbf16>, vector<8x8xf32> -> vector<8x8xf32>
      %c0_16 = arith.constant 0 : index
      %c0_17 = arith.constant 0 : index
      %23 = vector.load %arg7[%c0_16, %c0_17] : memref<8x8xf32, #tpu.memory_space<vmem>>, vector<8x8xf32>
      tpu.vector_store %arg7[%c0_16, %c0_17], %22 {strides = array<i32>} : memref<8x8xf32, #tpu.memory_space<vmem>>, vector<8x8xf32>,
    } else {
    }
    %c0_3 = arith.constant 0 : index
    %c0_4 = arith.constant 0 : index
    %12 = vector.load %arg6[%c0_3, %c0_4] : memref<8x8xf32, #tpu.memory_space<vmem>>, vector<8x8xf32>
    %cst_5 = arith.constant dense<0.000000e+00> : vector<8x8xf32>
    %13 = tpu.matmul %8, %8, %cst_5 {dimension_numbers = #tpu.dot_dimension_numbers<[1], [1], [0], [0], [0, 0, 1, 0], [], []>} : vector<8x128xbf16>, vector<8x128xbf16>, vector<8x8xf32> -> vector<8x8xf32>
    %14 = arith.addf %12, %13 : vector<8x8xf32>
    %c0_6 = arith.constant 0 : index
    %c0_7 = arith.constant 0 : index
    %15 = vector.load %arg6[%c0_6, %c0_7] : memref<8x8xf32, #tpu.memory_space<vmem>>, vector<8x8xf32>
    tpu.vector_store %arg6[%c0_6, %c0_7], %14 {strides = array<i32>} : memref<8x8xf32, #tpu.memory_space<vmem>>, vector<8x8xf32>,
    %c0_i32_8 = arith.constant 0 : i32
    %16 = arith.cmpi eq, %arg0, %c0_i32_8 : i32
    %17 = arith.extui %16 : i1 to i32
    %c0_i32_9 = arith.constant 0 : i32
    %18 = arith.cmpi ne, %17, %c0_i32_9 : i32
    scf.if %18 {
      %19 = tpu.iota {dimensions = array<i32: 0>} : vector<8x8xi32>
      %20 = tpu.iota {dimensions = array<i32: 1>} : vector<8x8xi32>
      %21 = arith.cmpi ne, %19, %20 : vector<8x8xi32>
      %22 = arith.extui %21 : vector<8x8xi1> to vector<8x8xi32>
      %23 = arith.sitofp %22 : vector<8x8xi32> to vector<8x8xf32>
      %cst_10 = arith.constant 1.000000e+00 : f32
      %24 = vector.broadcast %cst_10 : f32 to vector<8x1xf32>
      %c0_11 = arith.constant 0 : index
      %c0_12 = arith.constant 0 : index
      %25 = vector.load %arg6[%c0_11, %c0_12] : memref<8x8xf32, #tpu.memory_space<vmem>>, vector<8x8xf32>
      %26 = arith.mulf %25, %23 : vector<8x8xf32>
      %cst_13 = arith.constant dense<0.000000e+00> : vector<8xf32>
      %27 = vector.multi_reduction <add>, %26, %cst_13 [0] : vector<8x8xf32> to vector<8xf32>
      %28 = vector.shape_cast %27 : vector<8xf32> to vector<1x8xf32>
      %cst_14 = arith.constant 6.000000e+00 : f32
      %29 = vector.broadcast %cst_14 : f32 to vector<1x8xf32>
      %30 = arith.divf %28, %29 : vector<1x8xf32>
      %cst_15 = arith.constant dense<0.000000e+00> : vector<8x1xf32>
      %31 = tpu.matmul %26, %24, %cst_15 {dimension_numbers = #tpu.dot_dimension_numbers<[1], [0], [0], [1], [0, 0, 1, 1], [], []>} : vector<8x8xf32>, vector<8x1xf32>, vector<8x1xf32> -> vector<8x1xf32>
      %cst_16 = arith.constant 6.000000e+00 : f32
      %32 = vector.broadcast %cst_16 : f32 to vector<8x1xf32>
      %33 = arith.divf %31, %32 : vector<8x1xf32>
      %34 = vector.shape_cast %30 : vector<1x8xf32> to vector<1x1x8xf32>
      %cst_17 = arith.constant dense<0.000000e+00> : vector<1xf32>
      %35 = vector.multi_reduction <add>, %34, %cst_17 [1, 2] : vector<1x1x8xf32> to vector<1xf32>
      %36 = vector.shape_cast %35 : vector<1xf32> to vector<1x1x1xf32>
      %37 = vector.extract %36[0, 0, 0] : f32 from vector<1x1x1xf32>
      %cst_18 = arith.constant 1.400000e+01 : f32
      %38 = arith.divf %37, %cst_18 : f32
      %39 = vector.broadcast %38 : f32 to vector<8x1xf32>
      %40 = arith.subf %33, %39 : vector<8x1xf32>
      %41 = vector.broadcast %40 : vector<8x1xf32> to vector<8x8xf32>
      %42 = arith.subf %26, %41 : vector<8x8xf32>
      %43 = vector.broadcast %38 : f32 to vector<1x8xf32>
      %44 = arith.subf %30, %43 : vector<1x8xf32>
      %45 = vector.broadcast %44 : vector<1x8xf32> to vector<8x8xf32>
      %46 = arith.subf %42, %45 : vector<8x8xf32>
      %47 = arith.mulf %46, %23 : vector<8x8xf32>
      %c0_19 = arith.constant 0 : index
      %c0_20 = arith.constant 0 : index
      %48 = vector.load %arg6[%c0_19, %c0_20] : memref<8x8xf32, #tpu.memory_space<vmem>>, vector<8x8xf32>
      tpu.vector_store %arg6[%c0_19, %c0_20], %47 {strides = array<i32>} : memref<8x8xf32, #tpu.memory_space<vmem>>, vector<8x8xf32>,
      %c0_21 = arith.constant 0 : index
      %c0_22 = arith.constant 0 : index
      %49 = vector.load %arg7[%c0_21, %c0_22] : memref<8x8xf32, #tpu.memory_space<vmem>>, vector<8x8xf32>
      %50 = arith.mulf %49, %23 : vector<8x8xf32>
      %cst_23 = arith.constant dense<0.000000e+00> : vector<8xf32>
      %51 = vector.multi_reduction <add>, %50, %cst_23 [0] : vector<8x8xf32> to vector<8xf32>
      %52 = vector.shape_cast %51 : vector<8xf32> to vector<1x8xf32>
      %cst_24 = arith.constant 6.000000e+00 : f32
      %53 = vector.broadcast %cst_24 : f32 to vector<1x8xf32>
      %54 = arith.divf %52, %53 : vector<1x8xf32>
      %cst_25 = arith.constant dense<0.000000e+00> : vector<8x1xf32>
      %55 = tpu.matmul %50, %24, %cst_25 {dimension_numbers = #tpu.dot_dimension_numbers<[1], [0], [0], [1], [0, 0, 1, 1], [], []>} : vector<8x8xf32>, vector<8x1xf32>, vector<8x1xf32> -> vector<8x1xf32>
      %cst_26 = arith.constant 6.000000e+00 : f32
      %56 = vector.broadcast %cst_26 : f32 to vector<8x1xf32>
      %57 = arith.divf %55, %56 : vector<8x1xf32>
      %58 = vector.shape_cast %54 : vector<1x8xf32> to vector<1x1x8xf32>
      %cst_27 = arith.constant dense<0.000000e+00> : vector<1xf32>
      %59 = vector.multi_reduction <add>, %58, %cst_27 [1, 2] : vector<1x1x8xf32> to vector<1xf32>
      %60 = vector.shape_cast %59 : vector<1xf32> to vector<1x1x1xf32>
      %61 = vector.extract %60[0, 0, 0] : f32 from vector<1x1x1xf32>
      %cst_28 = arith.constant 1.400000e+01 : f32
      %62 = arith.divf %61, %cst_28 : f32
      %63 = vector.broadcast %62 : f32 to vector<8x1xf32>
      %64 = arith.subf %57, %63 : vector<8x1xf32>
      %65 = vector.broadcast %64 : vector<8x1xf32> to vector<8x8xf32>
      %66 = arith.subf %50, %65 : vector<8x8xf32>
      %67 = vector.broadcast %62 : f32 to vector<1x8xf32>
      %68 = arith.subf %54, %67 : vector<1x8xf32>
      %69 = vector.broadcast %68 : vector<1x8xf32> to vector<8x8xf32>
      %70 = arith.subf %66, %69 : vector<8x8xf32>
      %71 = arith.mulf %70, %23 : vector<8x8xf32>
      %c0_29 = arith.constant 0 : index
      %c0_30 = arith.constant 0 : index
      %72 = vector.load %arg7[%c0_29, %c0_30] : memref<8x8xf32, #tpu.memory_space<vmem>>, vector<8x8xf32>
      tpu.vector_store %arg7[%c0_29, %c0_30], %71 {strides = array<i32>} : memref<8x8xf32, #tpu.memory_space<vmem>>, vector<8x8xf32>,
      %c0_31 = arith.constant 0 : index
      %c0_32 = arith.constant 0 : index
      %73 = vector.load %arg6[%c0_31, %c0_32] : memref<8x8xf32, #tpu.memory_space<vmem>>, vector<8x8xf32>
      %c0_33 = arith.constant 0 : index
      %c0_34 = arith.constant 0 : index
      %74 = vector.load %arg7[%c0_33, %c0_34] : memref<8x8xf32, #tpu.memory_space<vmem>>, vector<8x8xf32>
      %75 = arith.mulf %73, %73 : vector<8x8xf32>
      %76 = vector.shape_cast %75 : vector<8x8xf32> to vector<1x8x8xf32>
      %cst_35 = arith.constant dense<0.000000e+00> : vector<1xf32>
      %77 = vector.multi_reduction <add>, %76, %cst_35 [1, 2] : vector<1x8x8xf32> to vector<1xf32>
      %78 = vector.shape_cast %77 : vector<1xf32> to vector<1x1x1xf32>
      %79 = vector.extract %78[0, 0, 0] : f32 from vector<1x1x1xf32>
      %80 = arith.mulf %74, %74 : vector<8x8xf32>
      %81 = vector.shape_cast %80 : vector<8x8xf32> to vector<1x8x8xf32>
      %cst_36 = arith.constant dense<0.000000e+00> : vector<1xf32>
      %82 = vector.multi_reduction <add>, %81, %cst_36 [1, 2] : vector<1x8x8xf32> to vector<1xf32>
      %83 = vector.shape_cast %82 : vector<1xf32> to vector<1x1x1xf32>
      %84 = vector.extract %83[0, 0, 0] : f32 from vector<1x1x1xf32>
      %85 = arith.mulf %73, %74 : vector<8x8xf32>
      %86 = vector.shape_cast %85 : vector<8x8xf32> to vector<1x8x8xf32>
      %cst_37 = arith.constant dense<0.000000e+00> : vector<1xf32>
      %87 = vector.multi_reduction <add>, %86, %cst_37 [1, 2] : vector<1x8x8xf32> to vector<1xf32>
      %88 = vector.shape_cast %87 : vector<1xf32> to vector<1x1x1xf32>
      %89 = vector.extract %88[0, 0, 0] : f32 from vector<1x1x1xf32>
      %90 = math.sqrt %79 : f32
      %91 = math.sqrt %84 : f32
      %92 = arith.mulf %90, %91 : f32
      %93 = arith.divf %89, %92 : f32
      %c0_38 = arith.constant 0 : index
      %94 = memref.load %arg3[%c0_38] : memref<1xf32, #tpu.memory_space<smem>>
      %95 = arith.subf %94, %93 : f32
      %cst_39 = arith.constant 0.000000e+00 : f32
      %96 = arith.maximumf %cst_39, %95 : f32
      %97 = arith.mulf %96, %96 : f32
      %c0_40 = arith.constant 0 : index
      %98 = memref.load %arg4[%c0_40] : memref<1xf32, #tpu.memory_space<smem>>
      memref.store %93, %arg4[%c0_40] : memref<1xf32, #tpu.memory_space<smem>>
      %c0_41 = arith.constant 0 : index
      %99 = memref.load %arg5[%c0_41] : memref<1xf32, #tpu.memory_space<smem>>
      memref.store %97, %arg5[%c0_41] : memref<1xf32, #tpu.memory_space<smem>>
    } else {
    }
    return
  }
  func.func @transform_0(%arg0: i32) -> (i32, i32) {
    %c0_i32 = arith.constant 0 : i32
    %c0_i32_0 = arith.constant 0 : i32
    return %c0_i32, %arg0 : i32, i32
  }
  func.func @transform_1(%arg0: i32) -> (i32, i32) {
    %c0_i32 = arith.constant 0 : i32
    %c0_i32_0 = arith.constant 0 : i32
    %c0_i32_1 = arith.constant 0 : i32
    return %c0_i32, %c0_i32_0 : i32, i32
  }
  func.func @transform_2(%arg0: i32) -> i32 {
    %c0_i32 = arith.constant 0 : i32
    %c0_i32_0 = arith.constant 0 : i32
    return %c0_i32 : i32
  }
  func.func @transform_3(%arg0: i32) -> i32 {
    %c0_i32 = arith.constant 0 : i32
    %c0_i32_0 = arith.constant 0 : i32
    return %c0_i32 : i32
  }
  func.func @transform_4(%arg0: i32) -> i32 {
    %c0_i32 = arith.constant 0 : i32
    %c0_i32_0 = arith.constant 0 : i32
    return %c0_i32 : i32
  }
}

</mosaic_0001>

<llo_original>
// kernel: attribute_embeddings_forward.1
$region0: #{attribute_embeddings_forward.1}
  #allocation0 [shape = 'u32[]', space=smem, size = 0x4, offset = 0x4, fixed_abs, tag = 'smem constant byte address 0x4 - core index']
  #allocation1 [shape = 'u32[72,128]{1,0:T(1,128)}', space=vmem, size = 0x9000, scoped, tag = 'internal scratch']
  #allocation2 [shape = 'f32[8,8]{1,0:T(8,128)}', space=vmem, size = 0x1000, scoped, tag = 'scratch operand']
  #allocation3 [shape = 'f32[8,8]{1,0:T(8,128)}', space=vmem, size = 0x1000, scoped, tag = 'scratch operand']
  #allocation4 [shape = 'f32[1]{0:T(128)S(6)}', space=smem, size = 0x200, scoped, tag = 'scoped memory for attribute_embeddings_forward.1']
  %s0 = inlined_call_operand.vmem [shape: bf16[8,128], index: 0, kind: input, shape index: {}]
  %s1 = inlined_call_operand.vmem [shape: bf16[8,128], index: 1, kind: input, shape index: {}]
  %s2 = inlined_call_operand.<no memory space> [shape: f32[1], index: 2, kind: input, shape index: {}]
  %s3 = inlined_call_operand.hbm [shape: f32[1], index: 3, kind: output, shape index: {0}]
  %s4 = inlined_call_operand.hbm [shape: f32[1], index: 4, kind: output, shape index: {1}]
  %5 = xla_tuple %s3, %s4
  %s6 = sld [smem:[#allocation0]]
  $region38: #{attribute_embeddings_forward.1} parent=0
    _
  %s8 = ssub.s32 1, %s6
  %s9 = scalar_select 0, %s8, %s6
  %10 = sst [smem:[#allocation4]] %s2
  $region1: #{attribute_embeddings_forward.1} parent=0
    #allocation5 [shape = 'u8[512]{0}', space=smem, size = 0x200, scoped, tag = 'output window, operand 0, single buffered']
    #allocation6 [shape = 's32[1]{0}', space=sflag, size = 0x4, scoped, tag = 'scoped memory for attribute_embeddings_forward.1']
    #allocation7 [shape = 'u8[512]{0}', space=smem, size = 0x200, scoped, tag = 'output window, operand 1, single buffered']
    #allocation8 [shape = 's32[1]{0}', space=sflag, size = 0x4, scoped, tag = 'scoped memory for attribute_embeddings_forward.1']
    %11 = vsyncpa [#allocation6], 0
    %12 = vsyncpa [#allocation8], 0
    // Predicated region
    $region2: #{attribute_embeddings_forward.1} parent=1 // pred_check
      _
    $region3: #{attribute_embeddings_forward.1} parent=1 // pred_check_branch
      %14 = sbr.rel (0) target = $region5
    $region4: #{attribute_embeddings_forward.1} parent=1 // pred_region
      _
    $region5: #{attribute_embeddings_forward.1} parent=1 // pred_fallthru
      _
    // Predicated region
    $region6: #{attribute_embeddings_forward.1} parent=1 // pred_check
      _
    $region7: #{attribute_embeddings_forward.1} parent=1 // pred_check_branch
      %16 = sbr.rel (0) target = $region9
    $region8: #{attribute_embeddings_forward.1} parent=1 // pred_region
      _
    $region9: #{attribute_embeddings_forward.1} parent=1 // pred_fallthru
      _
    // Predicated region
    $region10: #{attribute_embeddings_forward.1} parent=1 // pred_check
      _
    $region11: #{attribute_embeddings_forward.1} parent=1 // pred_check_branch
      %18 = sbr.rel (0) target = $region13
    $region12: #{attribute_embeddings_forward.1} parent=1 // pred_region
      _
    $region13: #{attribute_embeddings_forward.1} parent=1 // pred_fallthru
      _
    %v20 = vld [vmem:[%s0] sm:$0xf]
    %v21 = vunpack.c.l.bf16 %v20
    %v22 = vrot.slane %v21, 4
    %v23 = vadd.f32 %v21, %v22
    %v24 = vrot.slane %v23, 2
    %v25 = vadd.f32 %v23, %v24
    %v26 = vrot.slane %v25, 1
    %v27 = vadd.f32 %v25, %v26
    %v28 = vrcp.pop 8.0
    %v29 = vmul.f32 8.0, %v28
    %v30 = vsub.f32 1.0, %v29
    %v31 = vmul.f32 %v28, %v30
    %v32 = vadd.f32 %v28, %v31
    %vm33 = vweird.f32 %v28
    %v34 = vsel %vm33, %v28, %v32
    %v35 = vmul.f32 %v27, %v34
    %v36 = vsub.f32 %v21, %v35
    %v37 = vpack.c.bf16 %v36, %v36
    %p38 = scmp.eq.s32.totalorder 0, 0
    // Predicated region
    $region14: #{attribute_embeddings_forward.1} parent=1 // pred_check
      %p39 = pneg %p38
    $region15: #{attribute_embeddings_forward.1} parent=1 // pred_check_branch
      %41 = sbr.rel (%p39) target = $region17
    $region16: #{attribute_embeddings_forward.1} parent=1 // pred_region
      %vm42 = vcmask 64512
      %43 = vst.msk [vmem:[#allocation2] sm:$0xff] %vm42, 0.0
      %v44 = vld [vmem:[%s1] sm:$0xf]
      %45 = vmatpush.bf16.xpose.msra.mxu0 0
      %46 = vmatpush.bf16.xpose.msra.mxu0 0
      %47 = vmatpush.bf16.xpose.msra.mxu0 0
      %48 = vmatpush.bf16.xpose.msra.mxu0 0
      %49 = vmatpush.bf16.xpose.msra.mxu0 0
      %50 = vmatpush.bf16.xpose.msra.mxu0 0
      %51 = vmatpush.bf16.xpose.msra.mxu0 0
      %52 = vmatpush.bf16.xpose.msra.mxu0 %v44
      %53 = vmatmul.bf16.gmra.mxu0 %v44
      %v54 = vpop.f32.mrf.mxu0
      %v55 = vadd.f32 0.0, %v54
      %v56 = vpop.f32.mrf.mxu0
      %57 = vdwg.mxu0
      %58 = vst.msk [vmem:[#allocation3] sm:$0xff] %vm42, %v55
    $region17: #{attribute_embeddings_forward.1} parent=1 // pred_fallthru
      _
    %v59 = vld [vmem:[#allocation2] sm:$0xff]
    %60 = vmatpush.bf16.xpose.msra.mxu0 0
    %61 = vmatpush.bf16.xpose.msra.mxu0 0
    %62 = vmatpush.bf16.xpose.msra.mxu0 0
    %63 = vmatpush.bf16.xpose.msra.mxu0 0
    %64 = vmatpush.bf16.xpose.msra.mxu0 0
    %65 = vmatpush.bf16.xpose.msra.mxu0 0
    %66 = vmatpush.bf16.xpose.msra.mxu0 0
    %67 = vmatpush.bf16.xpose.msra.mxu0 %v37
    %68 = vmatmul.bf16.gmra.mxu0 %v37
    %v69 = vpop.f32.mrf.mxu0
    %v70 = vadd.f32 0.0, %v69
    %v71 = vpop.f32.mrf.mxu0
    %72 = vdwg.mxu0
    %v73 = vadd.f32 %v59, %v70
    %vm74 = vcmask 64512
    %75 = vst.msk [vmem:[#allocation2] sm:$0xff] %vm74, %v73
    // Predicated region
    $region18: #{attribute_embeddings_forward.1} parent=1 // pred_check
      %p76 = pneg %p38
    $region19: #{attribute_embeddings_forward.1} parent=1 // pred_check_branch
      %78 = sbr.rel (%p76) target = $region21
    $region20: #{attribute_embeddings_forward.1} parent=1 // pred_region
      %v79 = vlaneseq
      %v80 = vshrl.u32 %v79, 7
      %v81 = vlaneseq
      %v82 = vand.u32 %v81, 127
      %vm83 = vcmp.ne.s32.totalorder %v80, %v82
      %v84 = vsel %vm83, 1, 0
      %v85 = vcvt.s32.f32 %v84
      %v86 = vld [vmem:[#allocation2] sm:$0xff]
      %v87 = vmul.f32 %v86, %v85
      %v88 = vsel %vm74, %v87, 0.0
      %v89 = vrot.slane %v88, 4
      %v90 = vadd.f32 %v88, %v89
      %v91 = vrot.slane %v90, 2
      %v92 = vadd.f32 %v90, %v91
      %v93 = vrot.slane %v92, 1
      %v94 = vadd.f32 %v92, %v93
      %v95 = vrcp.pop 6.0
      %v96 = vmul.f32 6.0, %v95
      %v97 = vsub.f32 1.0, %v96
      %v98 = vmul.f32 %v95, %v97
      %v99 = vadd.f32 %v95, %v98
      %vm100 = vweird.f32 %v95
      %v101 = vsel %vm100, %v95, %v99
      %v102 = vmul.f32 %v94, %v101
      %v104 = vsel %vm74, %v87, 0
      %106 = vmatpush.msra.mxu0 0.0
      %107 = vmatpush.msra.mxu0 0.0
      %108 = vmatpush.msra.mxu0 0.0
      %109 = vmatpush.msra.mxu0 0.0
      %110 = vmatpush.msra.mxu0 0.0
      %111 = vmatpush.msra.mxu0 0.0
      %112 = vmatpush.msra.mxu0 0.0
      %113 = vmatpush.msra.mxu0 0.0
      %114 = vmatpush.msra.mxu0 0.0
      %115 = vmatpush.msra.mxu0 0.0
      %116 = vmatpush.msra.mxu0 0.0
      %117 = vmatpush.msra.mxu0 0.0
      %118 = vmatpush.msra.mxu0 0.0
      %119 = vmatpush.msra.mxu0 0.0
      %120 = vmatpush.msra.mxu0 0.0
      %121 = vmatpush.msra.mxu0 1.0
      %122 = vmatmul.f32.gmra.mxu0 %v104
      %v123 = vpop.f32.mrf.mxu0
      %v124 = vadd.f32 0.0, %v123
      %125 = vdwg.mxu0
      %v126 = vmul.f32 %v124, %v101
      %vm127 = vcmask 57344
      %v128 = vsel %vm127, %v102, 0.0
      %129 = vadd.xlane.f32.xlu0 %v128
      %v130 = vpop.xlane.xlu0 %129
      %v131 = vrot.slane %v130, 4
      %v132 = vadd.f32 %v130, %v131
      %v133 = vrot.slane %v132, 2
      %v134 = vadd.f32 %v132, %v133
      %v135 = vrot.slane %v134, 1
      %v136 = vadd.f32 %v134, %v135
      %s137 = vtos %v136
      %v138 = vrcp.pop 14.0
      %v139 = vmul.f32 14.0, %v138
      %v140 = vsub.f32 1.0, %v139
      %v141 = vmul.f32 %v138, %v140
      %v142 = vadd.f32 %v138, %v141
      %vm143 = vweird.f32 %v138
      %v144 = vsel %vm143, %v138, %v142
      %s145 = vtos %v144
      %s146 = smul.f32 %s137, %s145
      %v147 = vstv %s146
      %v148 = vsub.f32 %v126, %v147
      %150 = vset.pattern.permute.xlu0 0
      %151 = vperm.xlu0 %150, %v148
      %v152 = vpop.permute.xlu0 %151
      %v154 = vsub.f32 %v87, %v152
      %v155 = vsub.f32 %v102, %v147
      %v156 = vsub.f32 %v154, %v155
      %v157 = vmul.f32 %v156, %v85
      %158 = vst.msk [vmem:[#allocation2] sm:$0xff] %vm74, %v157
      %v159 = vld [vmem:[#allocation3] sm:$0xff]
      %v160 = vmul.f32 %v159, %v85
      %v161 = vsel %vm74, %v160, 0.0
      %v162 = vrot.slane %v161, 4
      %v163 = vadd.f32 %v161, %v162
      %v164 = vrot.slane %v163, 2
      %v165 = vadd.f32 %v163, %v164
      %v166 = vrot.slane %v165, 1
      %v167 = vadd.f32 %v165, %v166
      %v168 = vmul.f32 %v167, %v101
      %v170 = vsel %vm74, %v160, 0
      %172 = vmatpush.msra.mxu0 0.0
      %173 = vmatpush.msra.mxu0 0.0
      %174 = vmatpush.msra.mxu0 0.0
      %175 = vmatpush.msra.mxu0 0.0
      %176 = vmatpush.msra.mxu0 0.0
      %177 = vmatpush.msra.mxu0 0.0
      %178 = vmatpush.msra.mxu0 0.0
      %179 = vmatpush.msra.mxu0 0.0
      %180 = vmatpush.msra.mxu0 0.0
      %181 = vmatpush.msra.mxu0 0.0
      %182 = vmatpush.msra.mxu0 0.0
      %183 = vmatpush.msra.mxu0 0.0
      %184 = vmatpush.msra.mxu0 0.0
      %185 = vmatpush.msra.mxu0 0.0
      %186 = vmatpush.msra.mxu0 0.0
      %187 = vmatpush.msra.mxu0 1.0
      %188 = vmatmul.f32.gmra.mxu0 %v170
      %v189 = vpop.f32.mrf.mxu0
      %v190 = vadd.f32 0.0, %v189
      %191 = vdwg.mxu0
      %v192 = vmul.f32 %v190, %v101
      %v193 = vsel %vm127, %v168, 0.0
      %194 = vadd.xlane.f32.xlu0 %v193
      %v195 = vpop.xlane.xlu0 %194
      %v196 = vrot.slane %v195, 4
      %v197 = vadd.f32 %v195, %v196
      %v198 = vrot.slane %v197, 2
      %v199 = vadd.f32 %v197, %v198
      %v200 = vrot.slane %v199, 1
      %v201 = vadd.f32 %v199, %v200
      %s202 = vtos %v201
      %v203 = vrcp.pop 14.0
      %v204 = vmul.f32 14.0, %v203
      %v205 = vsub.f32 1.0, %v204
      %v206 = vmul.f32 %v203, %v205
      %v207 = vadd.f32 %v203, %v206
      %vm208 = vweird.f32 %v203
      %v209 = vsel %vm208, %v203, %v207
      %s210 = vtos %v209
      %s211 = smul.f32 %s202, %s210
      %v212 = vstv %s211
      %v213 = vsub.f32 %v192, %v212
      %215 = vset.pattern.permute.xlu0 0
      %216 = vperm.xlu0 %215, %v213
      %v217 = vpop.permute.xlu0 %216
      %v219 = vsub.f32 %v160, %v217
      %v220 = vsub.f32 %v168, %v212
      %v221 = vsub.f32 %v219, %v220
      %v222 = vmul.f32 %v221, %v85
      %223 = vst.msk [vmem:[#allocation3] sm:$0xff] %vm74, %v222
      %v224 = vld [vmem:[#allocation2] sm:$0xff]
      %v225 = vld [vmem:[#allocation3] sm:$0xff]
      %v226 = vmul.f32 %v224, %v224
      %v227 = vsel %vm74, %v226, 0.0
      %228 = vadd.xlane.f32.xlu0 %v227
      %v229 = vpop.xlane.xlu0 %228
      %v230 = vrot.slane %v229, 4
      %v231 = vadd.f32 %v229, %v230
      %v232 = vrot.slane %v231, 2
      %v233 = vadd.f32 %v231, %v232
      %v234 = vrot.slane %v233, 1
      %v235 = vadd.f32 %v233, %v234
      %s236 = vtos %v235
      %v237 = vmul.f32 %v225, %v225
      %v238 = vsel %vm74, %v237, 0.0
      %239 = vadd.xlane.f32.xlu0 %v238
      %v240 = vpop.xlane.xlu0 %239
      %v241 = vrot.slane %v240, 4
      %v242 = vadd.f32 %v240, %v241
      %v243 = vrot.slane %v242, 2
      %v244 = vadd.f32 %v242, %v243
      %v245 = vrot.slane %v244, 1
      %v246 = vadd.f32 %v244, %v245
      %s247 = vtos %v246
      %v248 = vmul.f32 %v224, %v225
      %v249 = vsel %vm74, %v248, 0.0
      %250 = vadd.xlane.f32.xlu0 %v249
      %v251 = vpop.xlane.xlu0 %250
      %v252 = vrot.slane %v251, 4
      %v253 = vadd.f32 %v251, %v252
      %v254 = vrot.slane %v253, 2
      %v255 = vadd.f32 %v253, %v254
      %v256 = vrot.slane %v255, 1
      %v257 = vadd.f32 %v255, %v256
      %s258 = vtos %v257
      %v259 = vstv %s236
      %v260 = vrsqrt.pop %v259
      %v261 = vmul.f32 %v260, %v259
      %v262 = vmul.f32 %v261, %v260
      %v263 = vmul.f32 0.5, %v262
      %v264 = vsub.f32 1.5, %v263
      %v265 = vmul.f32 %v260, %v264
      %v266 = vmul.f32 %v259, %v265
      %vm267 = vcmp.eq.f32.partialorder %v259, inf
      %v268 = vsel %vm267, %v259, %v266
      %vm269 = vcmp.eq.f32.partialorder %v259, 0.0
      %v270 = vand.u32 %v259, 2147483648
      %v271 = vsel %vm269, %v270, %v268
      %s272 = vtos %v271
      %v273 = vstv %s247
      %v274 = vrsqrt.pop %v273
      %v275 = vmul.f32 %v274, %v273
      %v276 = vmul.f32 %v275, %v274
      %v277 = vmul.f32 0.5, %v276
      %v278 = vsub.f32 1.5, %v277
      %v279 = vmul.f32 %v274, %v278
      %v280 = vmul.f32 %v273, %v279
      %vm281 = vcmp.eq.f32.partialorder %v273, inf
      %v282 = vsel %vm281, %v273, %v280
      %vm283 = vcmp.eq.f32.partialorder %v273, 0.0
      %v284 = vand.u32 %v273, 2147483648
      %v285 = vsel %vm283, %v284, %v282
      %s286 = vtos %v285
      %s287 = smul.f32 %s272, %s286
      %v288 = vstv %s287
      %v289 = vrcp.pop %v288
      %v290 = vmul.f32 %v288, %v289
      %v291 = vsub.f32 1.0, %v290
      %v292 = vmul.f32 %v289, %v291
      %v293 = vadd.f32 %v289, %v292
      %vm294 = vweird.f32 %v288
      %vm295 = vweird.f32 %v289
      %vm296 = vmor %vm294, %vm295
      %v297 = vsel %vm296, %v289, %v293
      %v298 = vand.u32 2147483647, %v288
      %vm299 = vcmp.eq.f32.partialorder %v298, 8.507059e+37
      %v300 = vand.u32 %v288, 2147483648
      %v301 = vor.u32 1.1754944e-38, %v300
      %v302 = vsel %vm299, %v301, %v297
      %s303 = vtos %v302
      %s304 = smul.f32 %s258, %s303
      %s305 = sld [smem:[#allocation4]]
      %s306 = ssub.f32 %s305, %s304
      %s307 = smax.f32 %s306, 0.0
      %s308 = smul.f32 %s307, %s307
      %s309 = scalar_lea.smem [#allocation5], 0
      %310 = sst [smem:[%s309]] %s304
      %s311 = scalar_lea.smem [#allocation7], 0
      %312 = sst [smem:[%s311]] %s308
    $region21: #{attribute_embeddings_forward.1} parent=1 // pred_fallthru
      _
    // Predicated region
    $region22: #{attribute_embeddings_forward.1} parent=1 // pred_check
      _
    $region23: #{attribute_embeddings_forward.1} parent=1 // pred_check_branch
      %314 = sbr.rel (0) target = $region25
    $region24: #{attribute_embeddings_forward.1} parent=1 // pred_region
      %316 = vsyncadd [#allocation6], 0
      %s318 = sshll.u32 %s3, 4
      %s319 = int_to_ptr.hbm [resolvable:$true] %s318
      %321 = dma.smem_to_hbm [#allocation5], 16, %s319, [#allocation6]
    $region25: #{attribute_embeddings_forward.1} parent=1 // pred_fallthru
      _
    // Predicated region
    $region26: #{attribute_embeddings_forward.1} parent=1 // pred_check
      _
    $region27: #{attribute_embeddings_forward.1} parent=1 // pred_check_branch
      %323 = sbr.rel (0) target = $region29
    $region28: #{attribute_embeddings_forward.1} parent=1 // pred_region
      %325 = vsyncadd [#allocation8], 0
      %s327 = sshll.u32 %s4, 4
      %s328 = int_to_ptr.hbm [resolvable:$true] %s327
      %330 = dma.smem_to_hbm [#allocation7], 16, %s328, [#allocation8]
    $region29: #{attribute_embeddings_forward.1} parent=1 // pred_fallthru
      _
    // Predicated region
    $region30: #{attribute_embeddings_forward.1} parent=1 // pred_check
      _
    $region31: #{attribute_embeddings_forward.1} parent=1 // pred_check_branch
      %332 = sbr.rel (0) target = $region33
    $region32: #{attribute_embeddings_forward.1} parent=1 // pred_region
      %334 = dma.done [#allocation6], 16
    $region33: #{attribute_embeddings_forward.1} parent=1 // pred_fallthru
      _
    // Predicated region
    $region34: #{attribute_embeddings_forward.1} parent=1 // pred_check
      _
    $region35: #{attribute_embeddings_forward.1} parent=1 // pred_check_branch
      %336 = sbr.rel (0) target = $region37
    $region36: #{attribute_embeddings_forward.1} parent=1 // pred_region
      %338 = dma.done [#allocation8], 16
    $region37: #{attribute_embeddings_forward.1} parent=1 // pred_fallthru
      _
    %339 = sfence
    %340 = vsyncpa [#allocation6], 1
    %341 = vsyncpa [#allocation8], 1

</llo_original>
